<compile_context>
chip_gen: v5e
topology: v5e:2x2
jax: 0.10.0
libtpu: 0.0.40
codegen_flags: <defaults>
</compile_context>

<pallas_src>
import functools

import jax
import jax.numpy as jnp
from jax.experimental import pallas as pl
from jax.experimental.pallas import tpu as pltpu


def _round_up(x, m):
    return ((x + m - 1) // m) * m


def _cdiv(a, b):
    return (a + b - 1) // b


# ---------------------------------------------------------------------------
# Kernels
# ---------------------------------------------------------------------------

def _composed_kernel(text_ref, audio_ref, wte_ref, wae_ref, beff_ref, out_ref):
    # out = text @ W_text_eff + audio @ W_audio_eff + b_eff
    # (bf16 operands, f32 MXU accumulation; bias broadcasts over the batch tile)
    out_ref[...] = (
        jnp.dot(text_ref[...], wte_ref[...], preferred_element_type=jnp.float32)
        + jnp.dot(audio_ref[...], wae_ref[...], preferred_element_type=jnp.float32)
        + beff_ref[...]
    )


def _split_kernel(text_ref, audio_ref, wt_ref, wa_ref, wfct_ref, wfca_ref,
                  beff_ref, out_ref):
    # Fallback for large class counts: classifier weight is pre-split into the
    # text/audio halves, so no (tm, 1024) concat is ever materialized.
    tfeat = jnp.dot(text_ref[...], wt_ref[...],
                    preferred_element_type=jnp.float32).astype(wfct_ref.dtype)
    afeat = jnp.dot(audio_ref[...], wa_ref[...],
                    preferred_element_type=jnp.float32).astype(wfca_ref.dtype)
    out_ref[...] = (
        jnp.dot(tfeat, wfct_ref[...], preferred_element_type=jnp.float32)
        + jnp.dot(afeat, wfca_ref[...], preferred_element_type=jnp.float32)
        + beff_ref[...]
    )


# ---------------------------------------------------------------------------
# One-time parameter preparation (call at init, NOT per forward step)
# ---------------------------------------------------------------------------

def prepare_params(params, *, compute_dtype=jnp.bfloat16):
    """Fold biases, pre-compose (or split) the classifier, pad class dim.

    params (raw, (in, out) weight layout -- note a PyTorch nn.Linear checkpoint
    stores (out, in) and must be transposed before calling this):
        wt (Dt,512), bt (1,512), wa (Da,512), ba (1,512), wfc (1024,C), bfc (1,C)
    """
    f32 = jnp.float32
    wt = params["wt"].astype(f32)
    wa = params["wa"].astype(f32)
    H = wt.shape[1]                         # 512
    wfc = params["wfc"].astype(f32)
    C = wfc.shape[1]
    C_p = _round_up(C, 128)                 # lane-dense output stores

    wfc_t, wfc_a = wfc[:H], wfc[H:]
    # Exact affine fold of branch biases through the classifier (f32).
    b_eff = (params["bt"].astype(f32) @ wfc_t
             + params["ba"].astype(f32) @ wfc_a
             + params["bfc"].astype(f32))
    b_eff = jnp.pad(b_eff, ((0, 0), (0, C_p - C)))          # (1, C_p) f32

    composed = C_p <= 512                   # composition wins for small C
    if composed:
        w_text_eff = jnp.pad(wt @ wfc_t, ((0, 0), (0, C_p - C)))    # (Dt, C_p)
        w_audio_eff = jnp.pad(wa @ wfc_a, ((0, 0), (0, C_p - C)))   # (Da, C_p)
        weights = (w_text_eff.astype(compute_dtype),
                   w_audio_eff.astype(compute_dtype))
    else:
        weights = (wt.astype(compute_dtype),
                   wa.astype(compute_dtype),
                   jnp.pad(wfc_t, ((0, 0), (0, C_p - C))).astype(compute_dtype),
                   jnp.pad(wfc_a, ((0, 0), (0, C_p - C))).astype(compute_dtype))

    return dict(composed=composed, weights=weights, b_eff=b_eff,
                num_classes=C, compute_dtype=compute_dtype)


# ---------------------------------------------------------------------------
# Forward wrapper
# ---------------------------------------------------------------------------

def _vmem_estimate(tm, Dt, Da, C_p, act_bytes, composed):
    # double-buffered activation/output tiles + single-buffered resident weights
    tiles = 2 * tm * (Dt + Da) * act_bytes + 2 * tm * C_p * 4
    if composed:
        weights = (Dt + Da) * C_p * act_bytes
    else:
        weights = (Dt + Da) * 512 * act_bytes + 2 * 512 * C_p * act_bytes
    return tiles + weights + C_p * 4


def text_audio_classifier(text, audio, params):
    """Fused forward pass (one pallas_call) matching the PyTorch module.

    `params` may be the raw parameter dict (it will be prepared on the fly) or,
    preferably, the result of prepare_params() computed once at init.
    """
    if "wfc" in params:                      # raw params -> prepare (per-call; slower)
        params = prepare_params(params)

    B, Dt = text.shape
    _, Da = audio.shape
    C = params["num_classes"]
    b_eff = params["b_eff"]
    C_p = b_eff.shape[1]
    cdt = params["compute_dtype"]
    act_bytes = jnp.dtype(cdt).itemsize
    composed = params["composed"]

    # ---- batch tiling: multiple of 16 (bf16 packing); >=2 grid steps for
    # large batches (megacore + DMA/compute overlap); VMEM-budget capped. ----
    if B <= 16:
        n_steps = 1
    else:
        n_steps = max(2, _cdiv(B, 256))      # fill the 256-row MXU when possible
    tm = _round_up(_cdiv(B, n_steps), 16)
    while (_vmem_estimate(tm, Dt, Da, C_p, act_bytes, composed) > (24 << 20)
           and tm > 16):
        n_steps += 1
        tm = _round_up(_cdiv(B, n_steps), 16)
    B_p = _round_up(B, tm)
    grid = (B_p // tm,)

    # Activations: pad only the batch dim to the tile grid; feature dims stay
    # unpadded (block last-dim == full array dim is allowed) to avoid an extra
    # HBM pass. Cast once to the MXU compute dtype.
    text_p = jnp.pad(text, ((0, B_p - B), (0, 0))).astype(cdt)
    audio_p = jnp.pad(audio, ((0, B_p - B), (0, 0))).astype(cdt)

    def tile_spec(d):
        return pl.BlockSpec((tm, d), lambda i: (i, 0))

    def resident(shape):
        # Grid-invariant block: lives in VMEM for the whole grid; one buffer is
        # enough (halves resident-weight VMEM -- matters on v7x's 64 MiB).
        return pl.BlockSpec(shape, lambda i: (0, 0),
                            pipeline_mode=pl.Buffered(1))

    weight_args = params["weights"]
    kernel = _composed_kernel if composed else _split_kernel

    in_specs = ([tile_spec(Dt), tile_spec(Da)]
                + [resident(w.shape) for w in weight_args]
                + [resident(b_eff.shape)])

    est = _vmem_estimate(tm, Dt, Da, C_p, act_bytes, composed)
    vmem_limit = int(min(max(2 * est, 32 << 20), 56 << 20))

    out_p = pl.pallas_call(
        kernel,
        out_shape=jax.ShapeDtypeStruct((B_p, C_p), jnp.float32),
        grid=grid,
        in_specs=in_specs,
        out_specs=pl.BlockSpec((tm, C_p), lambda i: (i, 0)),
        compiler_params=pltpu.CompilerParams(
            dimension_semantics=("parallel",),       # megacore sharding on v7x
            vmem_limit_bytes=vmem_limit),
    )(text_p, audio_p, *weight_args, b_eff)

    return out_p[:B, :C]


# ---------------------------------------------------------------------------
# Parameter init (weights stored in (in, out) layout, unlike PyTorch's (out, in))
# ---------------------------------------------------------------------------

def init_params(key, input_dim_text, input_dim_audio, num_classes, hidden=512):
    ks = jax.random.split(key, 6)

    def lin(kw, kb, fan_in, fan_out):
        bound = 1.0 / jnp.sqrt(fan_in)
        w = jax.random.uniform(kw, (fan_in, fan_out), jnp.float32, -bound, bound)
        b = jax.random.uniform(kb, (1, fan_out), jnp.float32, -bound, bound)
        return w, b

    wt, bt = lin(ks[0], ks[1], input_dim_text, hidden)
    wa, ba = lin(ks[2], ks[3], input_dim_audio, hidden)
    wfc, bfc = lin(ks[4], ks[5], 2 * hidden, num_classes)
    return {"wt": wt, "bt": bt, "wa": wa, "ba": ba, "wfc": wfc, "bfc": bfc}


def _reference(text, audio, params):
    # Pure-JAX f32 reference (same math as the PyTorch module, un-fused).
    return jnp.concatenate(
        [text @ params["wt"] + params["bt"],
         audio @ params["wa"] + params["ba"]], axis=1) @ params["wfc"] + params["bfc"]


if __name__ == "__main__":
    key = jax.random.PRNGKey(0)
    k_params, k_params2, k_text, k_audio = jax.random.split(key, 4)

    batch = 8
    input_dim_text = 64
    input_dim_audio = 48
    num_classes = 10

    text = jax.random.normal(k_text, (batch, input_dim_text), jnp.float32)
    audio = jax.random.normal(k_audio, (batch, input_dim_audio), jnp.float32)

    # --- small class count -> pre-composed 2-matmul kernel ---
    params = init_params(k_params, input_dim_text, input_dim_audio, num_classes)
    prepared = prepare_params(params)                      # one-time weight fold
    fwd = jax.jit(functools.partial(text_audio_classifier, params=prepared))
    out = jax.block_until_ready(fwd(text, audio))
    ref = _reference(text, audio, params)
    assert out.shape == (batch, num_classes)
    assert jnp.allclose(out, ref, atol=3e-2, rtol=3e-2), \
        f"composed path max abs err = {jnp.max(jnp.abs(out - ref))}"

    # --- large class count -> split-classifier 4-matmul fallback ---
    big_classes = 520
    params2 = init_params(k_params2, input_dim_text, input_dim_audio, big_classes)
    prepared2 = prepare_params(params2)
    fwd2 = jax.jit(functools.partial(text_audio_classifier, params=prepared2))
    out2 = jax.block_until_ready(fwd2(text, audio))
    ref2 = _reference(text, audio, params2)
    assert out2.shape == (batch, big_classes)
    assert jnp.allclose(out2, ref2, atol=3e-2, rtol=3e-2), \
        f"split path max abs err = {jnp.max(jnp.abs(out2 - ref2))}"

    print("KERNEL_OK")
</pallas_src>

<mosaic_0001>
module attributes {stable_mosaic.version = 11 : i64} {
  func.func @_composed_kernel(%arg0: i32, %arg1: memref<16x64xbf16, #tpu.memory_space<vmem>>, %arg2: memref<16x48xbf16, #tpu.memory_space<vmem>>, %arg3: memref<64x128xbf16, #tpu.memory_space<vmem>>, %arg4: memref<48x128xbf16, #tpu.memory_space<vmem>>, %arg5: memref<1x128xf32, #tpu.memory_space<vmem>>, %arg6: memref<16x128xf32, #tpu.memory_space<vmem>>) attributes {dimension_semantics = [#tpu.dimension_semantics<parallel>], iteration_bounds = array<i64: 1>, scalar_prefetch = 0 : i64, scratch_operands = 0 : i64, tpu.core_type = #tpu.core_type<tc>, window_params = [{transform_indices = @transform_0, window_bounds = array<i64: 16, 64>}, {transform_indices = @transform_1, window_bounds = array<i64: 16, 48>}, {pipeline_mode = #tpu.pipeline_mode<synchronous>, transform_indices = @transform_2, window_bounds = array<i64: 64, 128>}, {pipeline_mode = #tpu.pipeline_mode<synchronous>, transform_indices = @transform_3, window_bounds = array<i64: 48, 128>}, {pipeline_mode = #tpu.pipeline_mode<synchronous>, transform_indices = @transform_4, window_bounds = array<i64: 1, 128>}, {transform_indices = @transform_5, window_bounds = array<i64: 16, 128>}]} {
    %c0 = arith.constant 0 : index
    %c0_0 = arith.constant 0 : index
    %0 = vector.load %arg1[%c0, %c0_0] : memref<16x64xbf16, #tpu.memory_space<vmem>>, vector<16x64xbf16>
    %c0_1 = arith.constant 0 : index
    %c0_2 = arith.constant 0 : index
    %1 = vector.load %arg3[%c0_1, %c0_2] : memref<64x128xbf16, #tpu.memory_space<vmem>>, vector<64x128xbf16>
    %cst = arith.constant dense<0.000000e+00> : vector<16x128xf32>
    %2 = tpu.matmul %0, %1, %cst {dimension_numbers = #tpu.dot_dimension_numbers<[1], [0], [0], [1], [0, 0, 1, 1], [], []>} : vector<16x64xbf16>, vector<64x128xbf16>, vector<16x128xf32> -> vector<16x128xf32>
    %c0_3 = arith.constant 0 : index
    %c0_4 = arith.constant 0 : index
    %3 = vector.load %arg2[%c0_3, %c0_4] : memref<16x48xbf16, #tpu.memory_space<vmem>>, vector<16x48xbf16>
    %c0_5 = arith.constant 0 : index
    %c0_6 = arith.constant 0 : index
    %4 = vector.load %arg4[%c0_5, %c0_6] : memref<48x128xbf16, #tpu.memory_space<vmem>>, vector<48x128xbf16>
    %cst_7 = arith.constant dense<0.000000e+00> : vector<16x128xf32>
    %5 = tpu.matmul %3, %4, %cst_7 {dimension_numbers = #tpu.dot_dimension_numbers<[1], [0], [0], [1], [0, 0, 1, 1], [], []>} : vector<16x48xbf16>, vector<48x128xbf16>, vector<16x128xf32> -> vector<16x128xf32>
    %6 = arith.addf %2, %5 : vector<16x128xf32>
    %c0_8 = arith.constant 0 : index
    %c0_9 = arith.constant 0 : index
    %7 = vector.load %arg5[%c0_8, %c0_9] : memref<1x128xf32, #tpu.memory_space<vmem>>, vector<1x128xf32>
    %8 = vector.broadcast %7 : vector<1x128xf32> to vector<16x128xf32>
    %9 = arith.addf %6, %8 : vector<16x128xf32>
    %c0_10 = arith.constant 0 : index
    %c0_11 = arith.constant 0 : index
    %10 = vector.load %arg6[%c0_10, %c0_11] : memref<16x128xf32, #tpu.memory_space<vmem>>, vector<16x128xf32>
    tpu.vector_store %arg6[%c0_10, %c0_11], %9 {strides = array<i32>} : memref<16x128xf32, #tpu.memory_space<vmem>>, vector<16x128xf32>,
    return
  }
  func.func @transform_0(%arg0: i32) -> (i32, i32) {
    %c0_i32 = arith.constant 0 : i32
    %c0_i32_0 = arith.constant 0 : i32
    return %arg0, %c0_i32 : i32, i32
  }
  func.func @transform_1(%arg0: i32) -> (i32, i32) {
    %c0_i32 = arith.constant 0 : i32
    %c0_i32_0 = arith.constant 0 : i32
    return %arg0, %c0_i32 : i32, i32
  }
  func.func @transform_2(%arg0: i32) -> (i32, i32) {
    %c0_i32 = arith.constant 0 : i32
    %c0_i32_0 = arith.constant 0 : i32
    %c0_i32_1 = arith.constant 0 : i32
    return %c0_i32, %c0_i32_0 : i32, i32
  }
  func.func @transform_3(%arg0: i32) -> (i32, i32) {
    %c0_i32 = arith.constant 0 : i32
    %c0_i32_0 = arith.constant 0 : i32
    %c0_i32_1 = arith.constant 0 : i32
    return %c0_i32, %c0_i32_0 : i32, i32
  }
  func.func @transform_4(%arg0: i32) -> (i32, i32) {
    %c0_i32 = arith.constant 0 : i32
    %c0_i32_0 = arith.constant 0 : i32
    %c0_i32_1 = arith.constant 0 : i32
    return %c0_i32, %c0_i32_0 : i32, i32
  }
  func.func @transform_5(%arg0: i32) -> (i32, i32) {
    %c0_i32 = arith.constant 0 : i32
    %c0_i32_0 = arith.constant 0 : i32
    return %arg0, %c0_i32 : i32, i32
  }
}

</mosaic_0001>

<llo_original>
// kernel: text_audio_classifier.1
$region0: #{text_audio_classifier.1}
  #allocation0 [shape = 'u32[]', space=smem, size = 0x4, offset = 0x4, fixed_abs, tag = 'smem constant byte address 0x4 - core index']
  #allocation1 [shape = 'u32[72,128]{1,0:T(1,128)}', space=vmem, size = 0x9000, scoped, tag = 'internal scratch']
  %s0 = inlined_call_operand.vmem [shape: bf16[16,64], index: 0, kind: input, shape index: {}]
  %s1 = inlined_call_operand.vmem [shape: bf16[16,48], index: 1, kind: input, shape index: {}]
  %s2 = inlined_call_operand.hbm [shape: bf16[64,128], index: 2, kind: input, shape index: {}]
  %s3 = inlined_call_operand.vmem [shape: bf16[48,128], index: 3, kind: input, shape index: {}]
  %s4 = inlined_call_operand.vmem [shape: f32[1,128], index: 4, kind: input, shape index: {}]
  %s5 = inlined_call_operand.vmem [shape: f32[16,128], index: 5, kind: output, shape index: {}]
  %s6 = sld [smem:[#allocation0]]
  $region34: #{text_audio_classifier.1} parent=0
    _
  %s8 = ssub.s32 1, %s6
  %s9 = scalar_select 0, %s8, %s6
  $region1: #{text_audio_classifier.1} parent=0
    #allocation2 [shape = 'u8[16384]{0}', space=vmem, size = 0x4000, scoped, tag = 'input window, operand 2, single buffered']
    #allocation3 [shape = 's32[1]{0}', space=sflag, size = 0x4, scoped, tag = 'scoped memory for text_audio_classifier.1']
    %10 = vsyncpa [#allocation3], 0
    // Predicated region
    $region2: #{text_audio_classifier.1} parent=1 // pred_check
      _
    $region3: #{text_audio_classifier.1} parent=1 // pred_check_branch
      %12 = sbr.rel (0) target = $region5
    $region4: #{text_audio_classifier.1} parent=1 // pred_region
      _
    $region5: #{text_audio_classifier.1} parent=1 // pred_fallthru
      _
    // Predicated region
    $region6: #{text_audio_classifier.1} parent=1 // pred_check
      _
    $region7: #{text_audio_classifier.1} parent=1 // pred_check_branch
      %14 = sbr.rel (0) target = $region9
    $region8: #{text_audio_classifier.1} parent=1 // pred_region
      _
    $region9: #{text_audio_classifier.1} parent=1 // pred_fallthru
      _
    // Predicated region
    $region10: #{text_audio_classifier.1} parent=1 // pred_check
      _
    $region11: #{text_audio_classifier.1} parent=1 // pred_check_branch
      %16 = sbr.rel (0) target = $region13
    $region12: #{text_audio_classifier.1} parent=1 // pred_region
      %18 = vsyncadd [#allocation3], 0
      %s19 = sshll.u32 %s2, 4
      %s20 = int_to_ptr.hbm [resolvable:$true] %s19
      %s21 = sshll.u32 [#allocation2], 4
      %s22 = int_to_ptr.vmem [resolvable:$true] %s21
      %27 = dma.hbm_to_vmem [thread:$0]  %s20, 512, %s22, [#allocation3], 64, 64, 4
    $region13: #{text_audio_classifier.1} parent=1 // pred_fallthru
      _
    // Predicated region
    $region14: #{text_audio_classifier.1} parent=1 // pred_check
      _
    $region15: #{text_audio_classifier.1} parent=1 // pred_check_branch
      %29 = sbr.rel (0) target = $region17
    $region16: #{text_audio_classifier.1} parent=1 // pred_region
      _
    $region17: #{text_audio_classifier.1} parent=1 // pred_fallthru
      _
    // Predicated region
    $region18: #{text_audio_classifier.1} parent=1 // pred_check
      _
    $region19: #{text_audio_classifier.1} parent=1 // pred_check_branch
      %31 = sbr.rel (0) target = $region21
    $region20: #{text_audio_classifier.1} parent=1 // pred_region
      _
    $region21: #{text_audio_classifier.1} parent=1 // pred_fallthru
      _
    // Predicated region
    $region22: #{text_audio_classifier.1} parent=1 // pred_check
      _
    $region23: #{text_audio_classifier.1} parent=1 // pred_check_branch
      %33 = sbr.rel (0) target = $region25
    $region24: #{text_audio_classifier.1} parent=1 // pred_region
      %35 = dma.done [#allocation3], 512
    $region25: #{text_audio_classifier.1} parent=1 // pred_fallthru
      _
    %v37 = vld [vmem:[%s0] sm:$0xf]
    %v38 = vld [vmem:[%s0 + $0x4] sm:$0xf]
    %v39 = vld [vmem:[#allocation2] sm:$0xf]
    %v40 = vld [vmem:[#allocation2 + $0x4] sm:$0xf]
    %v41 = vld [vmem:[#allocation2 + $0x8] sm:$0xf]
    %v42 = vld [vmem:[#allocation2 + $0xc] sm:$0xf]
    %v43 = vld [vmem:[#allocation2 + $0x10] sm:$0xf]
    %v44 = vld [vmem:[#allocation2 + $0x14] sm:$0xf]
    %v45 = vld [vmem:[#allocation2 + $0x18] sm:$0xf]
    %v46 = vld [vmem:[#allocation2 + $0x1c] sm:$0xf]
    %v47 = vld [vmem:[%s1] sm:$0xf]
    %v48 = vld [vmem:[%s1 + $0x4] sm:$0xf]
    %v49 = vld [vmem:[%s3] sm:$0xf]
    %v50 = vld [vmem:[%s3 + $0x4] sm:$0xf]
    %v51 = vld [vmem:[%s3 + $0x8] sm:$0xf]
    %v52 = vld [vmem:[%s3 + $0xc] sm:$0xf]
    %v53 = vld [vmem:[%s3 + $0x10] sm:$0xf]
    %v54 = vld [vmem:[%s3 + $0x14] sm:$0xf]
    %v57 = vunpack.c.l.b16 %v47
    %v58 = vunpack.c.l.b16 %v48
    %v59 = vpack.c.b16 %v58, %v57
    %v66 = vunpack.c.l.b16 %v49
    %v67 = vunpack.c.l.b16 %v50
    %v68 = vunpack.c.l.b16 %v51
    %v69 = vunpack.c.l.b16 %v52
    %v70 = vunpack.c.l.b16 %v53
    %v71 = vunpack.c.l.b16 %v54
    %v72 = vpack.c.b16 %v67, %v66
    %v73 = vpack.c.b16 %v69, %v68
    %v74 = vpack.c.b16 %v71, %v70
    %vm78 = vcmask 392192
    %v80 = vsel %vm78, %v59, 0
    %82 = vmatpush.bf16.msra.mxu0 0
    %83 = vmatpush.bf16.msra.mxu0 0
    %84 = vmatpush.bf16.msra.mxu0 0
    %85 = vmatpush.bf16.msra.mxu0 0
    %86 = vmatpush.bf16.msra.mxu0 0
    %87 = vmatpush.bf16.msra.mxu0 %v74
    %88 = vmatpush.bf16.msra.mxu0 %v73
    %89 = vmatpush.bf16.msra.mxu0 %v72
    %90 = vmatmul.bf16.gmra.mxu0 %v80
    %v91 = vpop.f32.mrf.mxu0
    %v92 = vadd.f32 0.0, %v91
    %v93 = vpop.f32.mrf.mxu0
    %v94 = vadd.f32 0.0, %v93
    %95 = vdwg.mxu0
    %v98 = vunpack.c.l.b16 %v37
    %v99 = vunpack.c.l.b16 %v38
    %v100 = vpack.c.b16 %v99, %v98
    %v109 = vunpack.c.l.b16 %v39
    %v110 = vunpack.c.l.b16 %v40
    %v111 = vunpack.c.l.b16 %v41
    %v112 = vunpack.c.l.b16 %v42
    %v113 = vunpack.c.l.b16 %v43
    %v114 = vunpack.c.l.b16 %v44
    %v115 = vunpack.c.l.b16 %v45
    %v116 = vunpack.c.l.b16 %v46
    %v117 = vpack.c.b16 %v110, %v109
    %v118 = vpack.c.b16 %v112, %v111
    %v119 = vpack.c.b16 %v114, %v113
    %v120 = vpack.c.b16 %v116, %v115
    %vm125 = vcmask 523264
    %v127 = vsel %vm125, %v100, 0
    %129 = vmatpush.bf16.msra.mxu0 0
    %130 = vmatpush.bf16.msra.mxu0 0
    %131 = vmatpush.bf16.msra.mxu0 0
    %132 = vmatpush.bf16.msra.mxu0 0
    %133 = vmatpush.bf16.msra.mxu0 %v120
    %134 = vmatpush.bf16.msra.mxu0 %v119
    %135 = vmatpush.bf16.msra.mxu0 %v118
    %136 = vmatpush.bf16.msra.mxu0 %v117
    %137 = vmatmul.bf16.gmra.mxu0 %v127
    %v138 = vpop.f32.mrf.mxu0
    %v139 = vadd.f32 %v92, %v138
    %v140 = vpop.f32.mrf.mxu0
    %v141 = vadd.f32 %v94, %v140
    %142 = vdwg.mxu0
    %v143 = vld [vmem:[%s4] sm:$0x1]
    %v145 = vperm.slane %v143, 0
    %v147 = vadd.f32 %v139, %v145
    %v148 = vadd.f32 %v141, %v145
    %149 = vst [vmem:[%s5] sm:$0xff] %v147
    %150 = vst [vmem:[%s5 + $0x8] sm:$0xff] %v148
    // Predicated region
    $region26: #{text_audio_classifier.1} parent=1 // pred_check
      _
    $region27: #{text_audio_classifier.1} parent=1 // pred_check_branch
      %152 = sbr.rel (0) target = $region29
    $region28: #{text_audio_classifier.1} parent=1 // pred_region
      _
    $region29: #{text_audio_classifier.1} parent=1 // pred_fallthru
      _
    // Predicated region
    $region30: #{text_audio_classifier.1} parent=1 // pred_check
      _
    $region31: #{text_audio_classifier.1} parent=1 // pred_check_branch
      %154 = sbr.rel (0) target = $region33
    $region32: #{text_audio_classifier.1} parent=1 // pred_region
      _
    $region33: #{text_audio_classifier.1} parent=1 // pred_fallthru
      _
    %155 = vsyncpa [#allocation3], 1

</llo_original>
